<compile_context>
chip_gen: v6e
topology: v6e:2x2x1
jax: 0.10.0
libtpu: 0.0.40
codegen_flags: <defaults>
</compile_context>

<pallas_src>
import functools

import jax
import jax.numpy as jnp
from jax.experimental import pallas as pl
from jax.experimental.pallas import tpu as pltpu


def _round_up(x: int, m: int) -> int:
    return ((x + m - 1) // m) * m


def _triplet_classification_loss_kernel(
    za_ref, zp_ref, zn_ref, logits_ref, labels_ref,
    total_ref, trip_ref, ce_ref,
    *, margin: float, p_norm: int, eps: float, batch_size: int, block_rows: int,
):
    i = pl.program_id(0)

    # ---- init resident accumulators (outputs with constant index_map) ----
    @pl.when(i == 0)
    def _init():
        trip_ref[...] = jnp.zeros_like(trip_ref)
        ce_ref[...] = jnp.zeros_like(ce_ref)

    # validity mask for rows padded up to a multiple of the tile size
    row_ids = i * block_rows + jax.lax.broadcasted_iota(
        jnp.int32, (block_rows, 1), 0)
    valid = (row_ids < batch_size).astype(jnp.float32)            # (TB, 1)

    # ---- triplet loss partial sum (hot path: diff + lane reduction per row) ----
    # diff stays in the input dtype (bf16 on v6e/v7x saves HBM bytes); reduce in f32.
    # torch.nn.PairwiseDistance adds eps to the difference before the norm.
    d_ap_diff = (za_ref[...] - zp_ref[...]).astype(jnp.float32) + eps   # (TB, D)
    d_an_diff = (za_ref[...] - zn_ref[...]).astype(jnp.float32) + eps   # (TB, D)

    if p_norm == 2:
        d_ap = jnp.sqrt(jnp.sum(d_ap_diff * d_ap_diff, axis=-1, keepdims=True))
        d_an = jnp.sqrt(jnp.sum(d_an_diff * d_an_diff, axis=-1, keepdims=True))
    else:
        inv_p = 1.0 / float(p_norm)
        d_ap = jnp.power(
            jnp.sum(jnp.abs(d_ap_diff) ** p_norm, axis=-1, keepdims=True), inv_p)
        d_an = jnp.power(
            jnp.sum(jnp.abs(d_an_diff) ** p_norm, axis=-1, keepdims=True), inv_p)

    trip_per_example = jnp.maximum(d_ap - d_an + margin, 0.0) * valid   # (TB, 1)
    trip_ref[...] += jnp.sum(trip_per_example)

    # ---- cross entropy partial sum (log-softmax + label gather via one-hot mask) ----
    logits = logits_ref[...].astype(jnp.float32)                  # (TB, C)
    labels = labels_ref[...]                                      # (TB, 1) int32
    tb, num_classes = logits.shape

    row_max = jnp.max(logits, axis=-1, keepdims=True)             # (TB, 1)
    lse = row_max + jnp.log(
        jnp.sum(jnp.exp(logits - row_max), axis=-1, keepdims=True))
    class_ids = jax.lax.broadcasted_iota(jnp.int32, (tb, num_classes), 1)
    onehot = class_ids == labels                                  # (TB, C)
    true_logit = jnp.sum(jnp.where(onehot, logits, 0.0), axis=-1, keepdims=True)
    ce_per_example = (lse - true_logit) * valid                   # (TB, 1)
    ce_ref[...] += jnp.sum(ce_per_example)

    # ---- finalize: divide by the true batch size, build total ----
    @pl.when(i == pl.num_programs(0) - 1)
    def _finalize():
        inv_b = 1.0 / float(batch_size)
        trip_ref[...] = trip_ref[...] * inv_b
        ce_ref[...] = ce_ref[...] * inv_b
        total_ref[...] = trip_ref[...] + ce_ref[...]


def triplet_classification_loss(
    z_anchor, z_positive, z_negative, y_prob, y_true,
    *, margin: float = 1.0, p_norm: int = 2, eps: float = 1e-6,
    block_rows: int | None = None,
):
    """Returns (total_loss, triplet_loss, ce_loss) as float32 scalars."""
    B, D = z_anchor.shape
    C = y_prob.shape[-1]
    labels = y_true.reshape(B, 1).astype(jnp.int32)

    # Batch tile: multiple of 8 sublanes, ~512 rows for large batches (near HBM roofline),
    # single tile for small batches.  Shrink via block_rows on VMEM-tight parts (v5e/v7x).
    if block_rows is None:
        block_rows = min(512, _round_up(B, 8))
    tb = max(8, _round_up(int(block_rows), 8))
    b_pad = _round_up(B, tb)
    grid = (b_pad // tb,)

    if b_pad != B:
        pad = b_pad - B
        z_anchor = jnp.pad(z_anchor, ((0, pad), (0, 0)))
        z_positive = jnp.pad(z_positive, ((0, pad), (0, 0)))
        z_negative = jnp.pad(z_negative, ((0, pad), (0, 0)))
        y_prob = jnp.pad(y_prob, ((0, pad), (0, 0)))
        labels = jnp.pad(labels, ((0, pad), (0, 0)))

    kernel = functools.partial(
        _triplet_classification_loss_kernel,
        margin=float(margin), p_norm=int(p_norm), eps=float(eps),
        batch_size=int(B), block_rows=int(tb),
    )

    emb_spec = pl.BlockSpec((tb, D), lambda i: (i, 0))
    logits_spec = pl.BlockSpec((tb, C), lambda i: (i, 0))
    labels_spec = pl.BlockSpec((tb, 1), lambda i: (i, 0))
    # Scalar outputs: (1, 1) VMEM blocks with a constant index_map => resident accumulators.
    scalar_spec = pl.BlockSpec((1, 1), lambda i: (0, 0))
    scalar_out = jax.ShapeDtypeStruct((1, 1), jnp.float32)

    emb_bytes = 3 * b_pad * D * z_anchor.dtype.itemsize
    logit_bytes = b_pad * C * y_prob.dtype.itemsize
    cost = pl.CostEstimate(
        flops=8 * b_pad * D + 6 * b_pad * C,
        transcendentals=b_pad * C + 3 * b_pad,
        bytes_accessed=emb_bytes + logit_bytes + b_pad * 4 + 12,
    )

    total, trip, ce = pl.pallas_call(
        kernel,
        grid=grid,
        out_shape=(scalar_out, scalar_out, scalar_out),
        in_specs=[emb_spec, emb_spec, emb_spec, logits_spec, labels_spec],
        out_specs=(scalar_spec, scalar_spec, scalar_spec),
        compiler_params=pltpu.CompilerParams(
            dimension_semantics=("arbitrary",),   # accumulator across the batch grid axis
        ),
        cost_estimate=cost,
    )(z_anchor, z_positive, z_negative, y_prob, labels)

    return total[0, 0], trip[0, 0], ce[0, 0]


def _reference(z_a, z_p, z_n, logits, labels, margin=1.0, eps=1e-6):
    d_ap = jnp.sqrt(jnp.sum((z_a - z_p + eps) ** 2, axis=-1))
    d_an = jnp.sqrt(jnp.sum((z_a - z_n + eps) ** 2, axis=-1))
    trip = jnp.mean(jnp.maximum(d_ap - d_an + margin, 0.0))
    logp = jax.nn.log_softmax(logits, axis=-1)
    ce = -jnp.mean(jnp.take_along_axis(logp, labels[:, None], axis=-1))
    return trip + ce, trip, ce


if __name__ == "__main__":
    B, D, C = 12, 32, 16  # batch (not a multiple of 8 -> exercises padding/mask), dim, classes

    key = jax.random.PRNGKey(0)
    k_a, k_p, k_n, k_logits, k_labels = jax.random.split(key, 5)

    z_anchor = jax.random.normal(k_a, (B, D), dtype=jnp.float32)
    z_positive = z_anchor + 0.1 * jax.random.normal(k_p, (B, D), dtype=jnp.float32)
    z_negative = jax.random.normal(k_n, (B, D), dtype=jnp.float32)
    y_prob = jax.random.normal(k_logits, (B, C), dtype=jnp.float32)  # logits
    y_true = jax.random.randint(k_labels, (B,), 0, C, dtype=jnp.int32)

    ref_total, ref_trip, ref_ce = _reference(
        z_anchor, z_positive, z_negative, y_prob, y_true)

    # 1) default tiling (single tile for this small batch)
    total, trip, ce = triplet_classification_loss(
        z_anchor, z_positive, z_negative, y_prob, y_true,
        margin=1.0, p_norm=2,
    )
    jax.block_until_ready((total, trip, ce))
    assert jnp.allclose(trip, ref_trip, atol=1e-5), (trip, ref_trip)
    assert jnp.allclose(ce, ref_ce, atol=1e-5), (ce, ref_ce)
    assert jnp.allclose(total, ref_total, atol=1e-5), (total, ref_total)

    # 2) force multiple grid steps (block_rows=8 -> 2 tiles) to exercise the accumulator path
    total2, trip2, ce2 = triplet_classification_loss(
        z_anchor, z_positive, z_negative, y_prob, y_true,
        margin=1.0, p_norm=2, block_rows=8,
    )
    jax.block_until_ready((total2, trip2, ce2))
    assert jnp.allclose(trip2, ref_trip, atol=1e-5), (trip2, ref_trip)
    assert jnp.allclose(ce2, ref_ce, atol=1e-5), (ce2, ref_ce)
    assert jnp.allclose(total2, ref_total, atol=1e-5), (total2, ref_total)

    print("KERNEL_OK")
</pallas_src>

<mosaic_0001>
module attributes {stable_mosaic.version = 11 : i64} {
  func.func @_triplet_classification_loss_kernel(%arg0: i32, %arg1: memref<16x32xf32, #tpu.memory_space<vmem>>, %arg2: memref<16x32xf32, #tpu.memory_space<vmem>>, %arg3: memref<16x32xf32, #tpu.memory_space<vmem>>, %arg4: memref<16x16xf32, #tpu.memory_space<vmem>>, %arg5: memref<16x1xi32, #tpu.memory_space<vmem>>, %arg6: memref<1x1xf32, #tpu.memory_space<vmem>>, %arg7: memref<1x1xf32, #tpu.memory_space<vmem>>, %arg8: memref<1x1xf32, #tpu.memory_space<vmem>>) attributes {dimension_semantics = [#tpu.dimension_semantics<arbitrary>], iteration_bounds = array<i64: 1>, scalar_prefetch = 0 : i64, scratch_operands = 0 : i64, tpu.core_type = #tpu.core_type<tc>, window_params = [{transform_indices = @transform_0, window_bounds = array<i64: 16, 32>}, {transform_indices = @transform_1, window_bounds = array<i64: 16, 32>}, {transform_indices = @transform_2, window_bounds = array<i64: 16, 32>}, {transform_indices = @transform_3, window_bounds = array<i64: 16, 16>}, {transform_indices = @transform_4, window_bounds = array<i64: 16, 1>}, {pipeline_mode = #tpu.pipeline_mode<synchronous>, transform_indices = @transform_5, window_bounds = array<i64: 1, 1>}, {pipeline_mode = #tpu.pipeline_mode<synchronous>, transform_indices = @transform_6, window_bounds = array<i64: 1, 1>}, {pipeline_mode = #tpu.pipeline_mode<synchronous>, transform_indices = @transform_7, window_bounds = array<i64: 1, 1>}]} {
    %c0_i32 = arith.constant 0 : i32
    %0 = arith.cmpi eq, %arg0, %c0_i32 : i32
    %1 = arith.extui %0 : i1 to i32
    %c0_i32_0 = arith.constant 0 : i32
    %2 = arith.cmpi ne, %1, %c0_i32_0 : i32
    scf.if %2 {
      %cst_33 = arith.constant 0.000000e+00 : f32
      %74 = vector.broadcast %cst_33 : f32 to vector<1x1xf32>
      %c0_34 = arith.constant 0 : index
      %c0_35 = arith.constant 0 : index
      %75 = vector.load %arg7[%c0_34, %c0_35] : memref<1x1xf32, #tpu.memory_space<vmem>>, vector<1x1xf32>
      tpu.vector_store %arg7[%c0_34, %c0_35], %74 {strides = array<i32>} : memref<1x1xf32, #tpu.memory_space<vmem>>, vector<1x1xf32>,
      %cst_36 = arith.constant 0.000000e+00 : f32
      %76 = vector.broadcast %cst_36 : f32 to vector<1x1xf32>
      %c0_37 = arith.constant 0 : index
      %c0_38 = arith.constant 0 : index
      %77 = vector.load %arg8[%c0_37, %c0_38] : memref<1x1xf32, #tpu.memory_space<vmem>>, vector<1x1xf32>
      tpu.vector_store %arg8[%c0_37, %c0_38], %76 {strides = array<i32>} : memref<1x1xf32, #tpu.memory_space<vmem>>, vector<1x1xf32>,
    } else {
    }
    %c16_i32 = arith.constant 16 : i32
    %3 = arith.muli %arg0, %c16_i32 : i32
    %4 = tpu.iota {dimensions = array<i32: 0>} : vector<16x1xi32>
    %5 = vector.broadcast %3 : i32 to vector<16x1xi32>
    %6 = arith.addi %5, %4 : vector<16x1xi32>
    %c12_i32 = arith.constant 12 : i32
    %7 = vector.broadcast %c12_i32 : i32 to vector<16x1xi32>
    %8 = arith.cmpi slt, %6, %7 : vector<16x1xi32>
    %9 = arith.extui %8 : vector<16x1xi1> to vector<16x1xi32>
    %10 = arith.sitofp %9 : vector<16x1xi32> to vector<16x1xf32>
    %c0 = arith.constant 0 : index
    %c0_1 = arith.constant 0 : index
    %11 = vector.load %arg1[%c0, %c0_1] : memref<16x32xf32, #tpu.memory_space<vmem>>, vector<16x32xf32>
    %c0_2 = arith.constant 0 : index
    %c0_3 = arith.constant 0 : index
    %12 = vector.load %arg2[%c0_2, %c0_3] : memref<16x32xf32, #tpu.memory_space<vmem>>, vector<16x32xf32>
    %13 = arith.subf %11, %12 : vector<16x32xf32>
    %cst = arith.constant 9.99999997E-7 : f32
    %14 = vector.broadcast %cst : f32 to vector<16x32xf32>
    %15 = arith.addf %13, %14 : vector<16x32xf32>
    %c0_4 = arith.constant 0 : index
    %c0_5 = arith.constant 0 : index
    %16 = vector.load %arg1[%c0_4, %c0_5] : memref<16x32xf32, #tpu.memory_space<vmem>>, vector<16x32xf32>
    %c0_6 = arith.constant 0 : index
    %c0_7 = arith.constant 0 : index
    %17 = vector.load %arg3[%c0_6, %c0_7] : memref<16x32xf32, #tpu.memory_space<vmem>>, vector<16x32xf32>
    %18 = arith.subf %16, %17 : vector<16x32xf32>
    %cst_8 = arith.constant 9.99999997E-7 : f32
    %19 = vector.broadcast %cst_8 : f32 to vector<16x32xf32>
    %20 = arith.addf %18, %19 : vector<16x32xf32>
    %21 = arith.mulf %15, %15 : vector<16x32xf32>
    %cst_9 = arith.constant dense<0.000000e+00> : vector<16xf32>
    %22 = vector.multi_reduction <add>, %21, %cst_9 [1] : vector<16x32xf32> to vector<16xf32>
    %23 = vector.shape_cast %22 : vector<16xf32> to vector<16x1xf32>
    %24 = math.sqrt %23 : vector<16x1xf32>
    %25 = arith.mulf %20, %20 : vector<16x32xf32>
    %cst_10 = arith.constant dense<0.000000e+00> : vector<16xf32>
    %26 = vector.multi_reduction <add>, %25, %cst_10 [1] : vector<16x32xf32> to vector<16xf32>
    %27 = vector.shape_cast %26 : vector<16xf32> to vector<16x1xf32>
    %28 = math.sqrt %27 : vector<16x1xf32>
    %29 = arith.subf %24, %28 : vector<16x1xf32>
    %cst_11 = arith.constant 1.000000e+00 : f32
    %30 = vector.broadcast %cst_11 : f32 to vector<16x1xf32>
    %31 = arith.addf %29, %30 : vector<16x1xf32>
    %cst_12 = arith.constant 0.000000e+00 : f32
    %32 = vector.broadcast %cst_12 : f32 to vector<16x1xf32>
    %33 = arith.maximumf %31, %32 : vector<16x1xf32>
    %34 = arith.mulf %33, %10 : vector<16x1xf32>
    %c0_13 = arith.constant 0 : index
    %c0_14 = arith.constant 0 : index
    %35 = vector.load %arg7[%c0_13, %c0_14] : memref<1x1xf32, #tpu.memory_space<vmem>>, vector<1x1xf32>
    %36 = vector.shape_cast %34 : vector<16x1xf32> to vector<1x16x1xf32>
    %cst_15 = arith.constant dense<0.000000e+00> : vector<1xf32>
    %37 = vector.multi_reduction <add>, %36, %cst_15 [1, 2] : vector<1x16x1xf32> to vector<1xf32>
    %38 = vector.shape_cast %37 : vector<1xf32> to vector<1x1x1xf32>
    %39 = vector.extract %38[0, 0, 0] : f32 from vector<1x1x1xf32>
    %40 = vector.broadcast %39 : f32 to vector<1x1xf32>
    %41 = arith.addf %35, %40 : vector<1x1xf32>
    %c0_16 = arith.constant 0 : index
    %c0_17 = arith.constant 0 : index
    %42 = vector.load %arg7[%c0_16, %c0_17] : memref<1x1xf32, #tpu.memory_space<vmem>>, vector<1x1xf32>
    tpu.vector_store %arg7[%c0_16, %c0_17], %41 {strides = array<i32>} : memref<1x1xf32, #tpu.memory_space<vmem>>, vector<1x1xf32>,
    %c0_18 = arith.constant 0 : index
    %c0_19 = arith.constant 0 : index
    %43 = vector.load %arg4[%c0_18, %c0_19] : memref<16x16xf32, #tpu.memory_space<vmem>>, vector<16x16xf32>
    %c0_20 = arith.constant 0 : index
    %c0_21 = arith.constant 0 : index
    %44 = vector.load %arg5[%c0_20, %c0_21] : memref<16x1xi32, #tpu.memory_space<vmem>>, vector<16x1xi32>
    %cst_22 = arith.constant dense<0xFF800000> : vector<16xf32>
    %45 = vector.multi_reduction <maximumf>, %43, %cst_22 [1] : vector<16x16xf32> to vector<16xf32>
    %46 = vector.shape_cast %45 : vector<16xf32> to vector<16x1xf32>
    %47 = vector.broadcast %46 : vector<16x1xf32> to vector<16x16xf32>
    %48 = arith.subf %43, %47 : vector<16x16xf32>
    %49 = math.exp %48 : vector<16x16xf32>
    %cst_23 = arith.constant dense<0.000000e+00> : vector<16xf32>
    %50 = vector.multi_reduction <add>, %49, %cst_23 [1] : vector<16x16xf32> to vector<16xf32>
    %51 = vector.shape_cast %50 : vector<16xf32> to vector<16x1xf32>
    %52 = math.log %51 : vector<16x1xf32>
    %53 = arith.addf %46, %52 : vector<16x1xf32>
    %54 = tpu.iota {dimensions = array<i32: 1>} : vector<16x16xi32>
    %55 = vector.broadcast %44 : vector<16x1xi32> to vector<16x16xi32>
    %56 = arith.cmpi eq, %54, %55 : vector<16x16xi32>
    %cst_24 = arith.constant 0.000000e+00 : f32
    %57 = vector.broadcast %cst_24 : f32 to vector<16x16xf32>
    %58 = arith.select %56, %43, %57 : vector<16x16xi1>, vector<16x16xf32>
    %cst_25 = arith.constant dense<0.000000e+00> : vector<16xf32>
    %59 = vector.multi_reduction <add>, %58, %cst_25 [1] : vector<16x16xf32> to vector<16xf32>
    %60 = vector.shape_cast %59 : vector<16xf32> to vector<16x1xf32>
    %61 = arith.subf %53, %60 : vector<16x1xf32>
    %62 = arith.mulf %61, %10 : vector<16x1xf32>
    %c0_26 = arith.constant 0 : index
    %c0_27 = arith.constant 0 : index
    %63 = vector.load %arg8[%c0_26, %c0_27] : memref<1x1xf32, #tpu.memory_space<vmem>>, vector<1x1xf32>
    %64 = vector.shape_cast %62 : vector<16x1xf32> to vector<1x16x1xf32>
    %cst_28 = arith.constant dense<0.000000e+00> : vector<1xf32>
    %65 = vector.multi_reduction <add>, %64, %cst_28 [1, 2] : vector<1x16x1xf32> to vector<1xf32>
    %66 = vector.shape_cast %65 : vector<1xf32> to vector<1x1x1xf32>
    %67 = vector.extract %66[0, 0, 0] : f32 from vector<1x1x1xf32>
    %68 = vector.broadcast %67 : f32 to vector<1x1xf32>
    %69 = arith.addf %63, %68 : vector<1x1xf32>
    %c0_29 = arith.constant 0 : index
    %c0_30 = arith.constant 0 : index
    %70 = vector.load %arg8[%c0_29, %c0_30] : memref<1x1xf32, #tpu.memory_space<vmem>>, vector<1x1xf32>
    tpu.vector_store %arg8[%c0_29, %c0_30], %69 {strides = array<i32>} : memref<1x1xf32, #tpu.memory_space<vmem>>, vector<1x1xf32>,
    %c0_i32_31 = arith.constant 0 : i32
    %71 = arith.cmpi eq, %arg0, %c0_i32_31 : i32
    %72 = arith.extui %71 : i1 to i32
    %c0_i32_32 = arith.constant 0 : i32
    %73 = arith.cmpi ne, %72, %c0_i32_32 : i32
    scf.if %73 {
      %c0_33 = arith.constant 0 : index
      %c0_34 = arith.constant 0 : index
      %74 = vector.load %arg7[%c0_33, %c0_34] : memref<1x1xf32, #tpu.memory_space<vmem>>, vector<1x1xf32>
      %cst_35 = arith.constant 0.0833333358 : f32
      %75 = vector.broadcast %cst_35 : f32 to vector<1x1xf32>
      %76 = arith.mulf %74, %75 : vector<1x1xf32>
      %c0_36 = arith.constant 0 : index
      %c0_37 = arith.constant 0 : index
      %77 = vector.load %arg7[%c0_36, %c0_37] : memref<1x1xf32, #tpu.memory_space<vmem>>, vector<1x1xf32>
      tpu.vector_store %arg7[%c0_36, %c0_37], %76 {strides = array<i32>} : memref<1x1xf32, #tpu.memory_space<vmem>>, vector<1x1xf32>,
      %c0_38 = arith.constant 0 : index
      %c0_39 = arith.constant 0 : index
      %78 = vector.load %arg8[%c0_38, %c0_39] : memref<1x1xf32, #tpu.memory_space<vmem>>, vector<1x1xf32>
      %cst_40 = arith.constant 0.0833333358 : f32
      %79 = vector.broadcast %cst_40 : f32 to vector<1x1xf32>
      %80 = arith.mulf %78, %79 : vector<1x1xf32>
      %c0_41 = arith.constant 0 : index
      %c0_42 = arith.constant 0 : index
      %81 = vector.load %arg8[%c0_41, %c0_42] : memref<1x1xf32, #tpu.memory_space<vmem>>, vector<1x1xf32>
      tpu.vector_store %arg8[%c0_41, %c0_42], %80 {strides = array<i32>} : memref<1x1xf32, #tpu.memory_space<vmem>>, vector<1x1xf32>,
      %c0_43 = arith.constant 0 : index
      %c0_44 = arith.constant 0 : index
      %82 = vector.load %arg7[%c0_43, %c0_44] : memref<1x1xf32, #tpu.memory_space<vmem>>, vector<1x1xf32>
      %c0_45 = arith.constant 0 : index
      %c0_46 = arith.constant 0 : index
      %83 = vector.load %arg8[%c0_45, %c0_46] : memref<1x1xf32, #tpu.memory_space<vmem>>, vector<1x1xf32>
      %84 = arith.addf %82, %83 : vector<1x1xf32>
      %c0_47 = arith.constant 0 : index
      %c0_48 = arith.constant 0 : index
      %85 = vector.load %arg6[%c0_47, %c0_48] : memref<1x1xf32, #tpu.memory_space<vmem>>, vector<1x1xf32>
      tpu.vector_store %arg6[%c0_47, %c0_48], %84 {strides = array<i32>} : memref<1x1xf32, #tpu.memory_space<vmem>>, vector<1x1xf32>,
    } else {
    }
    return
  }
  func.func @transform_0(%arg0: i32) -> (i32, i32) {
    %c0_i32 = arith.constant 0 : i32
    %c0_i32_0 = arith.constant 0 : i32
    return %arg0, %c0_i32 : i32, i32
  }
  func.func @transform_1(%arg0: i32) -> (i32, i32) {
    %c0_i32 = arith.constant 0 : i32
    %c0_i32_0 = arith.constant 0 : i32
    return %arg0, %c0_i32 : i32, i32
  }
  func.func @transform_2(%arg0: i32) -> (i32, i32) {
    %c0_i32 = arith.constant 0 : i32
    %c0_i32_0 = arith.constant 0 : i32
    return %arg0, %c0_i32 : i32, i32
  }
  func.func @transform_3(%arg0: i32) -> (i32, i32) {
    %c0_i32 = arith.constant 0 : i32
    %c0_i32_0 = arith.constant 0 : i32
    return %arg0, %c0_i32 : i32, i32
  }
  func.func @transform_4(%arg0: i32) -> (i32, i32) {
    %c0_i32 = arith.constant 0 : i32
    %c0_i32_0 = arith.constant 0 : i32
    return %arg0, %c0_i32 : i32, i32
  }
  func.func @transform_5(%arg0: i32) -> (i32, i32) {
    %c0_i32 = arith.constant 0 : i32
    %c0_i32_0 = arith.constant 0 : i32
    %c0_i32_1 = arith.constant 0 : i32
    return %c0_i32, %c0_i32_0 : i32, i32
  }
  func.func @transform_6(%arg0: i32) -> (i32, i32) {
    %c0_i32 = arith.constant 0 : i32
    %c0_i32_0 = arith.constant 0 : i32
    %c0_i32_1 = arith.constant 0 : i32
    return %c0_i32, %c0_i32_0 : i32, i32
  }
  func.func @transform_7(%arg0: i32) -> (i32, i32) {
    %c0_i32 = arith.constant 0 : i32
    %c0_i32_0 = arith.constant 0 : i32
    %c0_i32_1 = arith.constant 0 : i32
    return %c0_i32, %c0_i32_0 : i32, i32
  }
}

</mosaic_0001>

<llo_original>
// kernel: tpu_custom_call.1
$region0: #{tpu_custom_call.1}
  #allocation0 [shape = 'u32[]', space=smem, size = 0x4, offset = 0x4, fixed_abs, tag = 'smem constant byte address 0x4 - core index']
  #allocation1 [shape = 'u32[144,128]{1,0:T(1,128)}', space=vmem, size = 0x12000, scoped, tag = 'internal scratch']
  %s0 = inlined_call_operand.vmem [shape: f32[16,32], index: 0, kind: input, shape index: {}]
  %s1 = inlined_call_operand.hbm [shape: f32[16,32], index: 1, kind: input, shape index: {}]
  %s2 = inlined_call_operand.hbm [shape: f32[16,32], index: 2, kind: input, shape index: {}]
  %s3 = inlined_call_operand.hbm [shape: f32[16,16], index: 3, kind: input, shape index: {}]
  %s4 = inlined_call_operand.vmem [shape: s32[16,1], index: 4, kind: input, shape index: {}]
  %s5 = inlined_call_operand.hbm [shape: f32[1,1], index: 5, kind: output, shape index: {0}]
  %s6 = inlined_call_operand.hbm [shape: f32[1,1], index: 6, kind: output, shape index: {1}]
  %s7 = inlined_call_operand.hbm [shape: f32[1,1], index: 7, kind: output, shape index: {2}]
  %8 = xla_tuple %s5, %s6, %s7
  %s9 = sld [smem:[#allocation0]]
  $region66: #{tpu_custom_call.1} parent=0
    _
  %s11 = ssub.s32 1, %s9
  %s12 = scalar_select 0, %s11, %s9
  $region1: #{tpu_custom_call.1} parent=0
    #allocation2 [shape = 'u8[8192]{0}', space=vmem, size = 0x2000, scoped, tag = 'input window, operand 1, single buffered']
    #allocation3 [shape = 's32[1]{0}', space=sflag, size = 0x4, scoped, tag = 'scoped memory for tpu_custom_call.1']
    #allocation4 [shape = 's32[1]{0}', space=sflag, size = 0x4, scoped, tag = 'scoped memory for tpu_custom_call.1']
    #allocation5 [shape = 'u8[8192]{0}', space=vmem, size = 0x2000, scoped, tag = 'input window, operand 2, single buffered']
    #allocation6 [shape = 's32[1]{0}', space=sflag, size = 0x4, scoped, tag = 'scoped memory for tpu_custom_call.1']
    #allocation7 [shape = 'u8[8192]{0}', space=vmem, size = 0x2000, scoped, tag = 'input window, operand 3, single buffered']
    #allocation8 [shape = 'u8[512]{0}', space=vmem, size = 0x400, scoped, tag = 'output window, operand 0, single buffered']
    #allocation9 [shape = 'u8[512]{0}', space=vmem, size = 0x400, scoped, tag = 'output window, operand 1, single buffered']
    #allocation10 [shape = 's32[1]{0}', space=sflag, size = 0x4, scoped, tag = 'scoped memory for tpu_custom_call.1']
    #allocation11 [shape = 'u8[512]{0}', space=vmem, size = 0x400, scoped, tag = 'output window, operand 2, single buffered']
    %13 = vsyncpa [#allocation3], 0
    %14 = vsyncpa [#allocation6], 0
    %15 = vsyncpa [#allocation4], 0
    %16 = vsyncpa [#allocation10], 0
    // Predicated region
    $region2: #{tpu_custom_call.1} parent=1 // pred_check
      _
    $region3: #{tpu_custom_call.1} parent=1 // pred_check_branch
      %18 = sbr.rel (0) target = $region5
    $region4: #{tpu_custom_call.1} parent=1 // pred_region
      _
    $region5: #{tpu_custom_call.1} parent=1 // pred_fallthru
      _
    // Predicated region
    $region6: #{tpu_custom_call.1} parent=1 // pred_check
      _
    $region7: #{tpu_custom_call.1} parent=1 // pred_check_branch
      %20 = sbr.rel (0) target = $region9
    $region8: #{tpu_custom_call.1} parent=1 // pred_region
      %s22 = ssub.s32 256, 256
      %23 = vsyncadd [#allocation3], %s22
      %s24 = sshll.u32 [#allocation2], 4
      %s25 = int_to_ptr.vmem [resolvable:$true] %s24
      %30 = dma.hbm_to_vmem [thread:$0]  %s1, 256, %s25, [#allocation3], 128, 128, 8
    $region9: #{tpu_custom_call.1} parent=1 // pred_fallthru
      _
    // Predicated region
    $region10: #{tpu_custom_call.1} parent=1 // pred_check
      _
    $region11: #{tpu_custom_call.1} parent=1 // pred_check_branch
      %32 = sbr.rel (0) target = $region13
    $region12: #{tpu_custom_call.1} parent=1 // pred_region
      %s34 = ssub.s32 256, 256
      %35 = vsyncadd [#allocation6], %s34
      %s36 = sshll.u32 [#allocation5], 4
      %s37 = int_to_ptr.vmem [resolvable:$true] %s36
      %42 = dma.hbm_to_vmem [thread:$0]  %s2, 256, %s37, [#allocation6], 128, 128, 8
    $region13: #{tpu_custom_call.1} parent=1 // pred_fallthru
      _
    // Predicated region
    $region14: #{tpu_custom_call.1} parent=1 // pred_check
      _
    $region15: #{tpu_custom_call.1} parent=1 // pred_check_branch
      %44 = sbr.rel (0) target = $region17
    $region16: #{tpu_custom_call.1} parent=1 // pred_region
      %s46 = ssub.s32 256, 256
      %47 = vsyncadd [#allocation6], %s46
      %s48 = sshll.u32 [#allocation7], 4
      %s49 = int_to_ptr.vmem [resolvable:$true] %s48
      %54 = dma.hbm_to_vmem [thread:$0]  %s3, 256, %s49, [#allocation6], 128, 128, 8
    $region17: #{tpu_custom_call.1} parent=1 // pred_fallthru
      _
    // Predicated region
    $region18: #{tpu_custom_call.1} parent=1 // pred_check
      _
    $region19: #{tpu_custom_call.1} parent=1 // pred_check_branch
      %56 = sbr.rel (0) target = $region21
    $region20: #{tpu_custom_call.1} parent=1 // pred_region
      _
    $region21: #{tpu_custom_call.1} parent=1 // pred_fallthru
      _
    // Predicated region
    $region22: #{tpu_custom_call.1} parent=1 // pred_check
      _
    $region23: #{tpu_custom_call.1} parent=1 // pred_check_branch
      %58 = sbr.rel (0) target = $region25
    $region24: #{tpu_custom_call.1} parent=1 // pred_region
      %59 = dma.done [#allocation3], 256
    $region25: #{tpu_custom_call.1} parent=1 // pred_fallthru
      _
    // Predicated region
    $region26: #{tpu_custom_call.1} parent=1 // pred_check
      _
    $region27: #{tpu_custom_call.1} parent=1 // pred_check_branch
      %61 = sbr.rel (0) target = $region29
    $region28: #{tpu_custom_call.1} parent=1 // pred_region
      %62 = dma.done [#allocation6], 256
    $region29: #{tpu_custom_call.1} parent=1 // pred_fallthru
      _
    // Predicated region
    $region30: #{tpu_custom_call.1} parent=1 // pred_check
      _
    $region31: #{tpu_custom_call.1} parent=1 // pred_check_branch
      %64 = sbr.rel (0) target = $region33
    $region32: #{tpu_custom_call.1} parent=1 // pred_region
      %65 = dma.done [#allocation6], 256
    $region33: #{tpu_custom_call.1} parent=1 // pred_fallthru
      _
    %p66 = scmp.eq.s32.totalorder 0, 0
    // Predicated region
    $region34: #{tpu_custom_call.1} parent=1 // pred_check
      %p67 = pneg %p66
    $region35: #{tpu_custom_call.1} parent=1 // pred_check_branch
      %69 = sbr.rel (%p67) target = $region37
    $region36: #{tpu_custom_call.1} parent=1 // pred_region
      %vm70 = vcmask 0
      %71 = vst.msk [vmem:[#allocation9] sm:$0x1] %vm70, 0.0
      %72 = vst.msk [vmem:[#allocation11] sm:$0x1] %vm70, 0.0
    $region37: #{tpu_custom_call.1} parent=1 // pred_fallthru
      _
    %s73 = smul.u32 0, 16
    %v74 = vlaneseq
    %v75 = vshrl.u32 %v74, 7
    %v76 = vadd.s32 %v75, 8
    %v77 = vstv %s73
    %v78 = vadd.s32 %v77, %v75
    %v79 = vadd.s32 %v77, %v76
    %vm80 = vcmp.lt.s32.totalorder %v78, 12
    %vm81 = vcmp.lt.s32.totalorder %v79, 12
    %v82 = vsel %vm80, 1, 0
    %v83 = vsel %vm81, 1, 0
    %v84 = vcvt.s32.f32 %v82
    %v85 = vcvt.s32.f32 %v83
    %v86 = vld [vmem:[%s0] sm:$0xff]
    %v87 = vld [vmem:[%s0 + $0x8] sm:$0xff]
    %v88 = vld [vmem:[#allocation2] sm:$0xff]
    %v89 = vld [vmem:[#allocation2 + $0x8] sm:$0xff]
    %v90 = vsub.f32 %v86, %v88
    %v91 = vsub.f32 %v87, %v89
    %v92 = vadd.f32 %v90, 1e-06
    %v93 = vadd.f32 %v91, 1e-06
    %v94 = vld [vmem:[#allocation5] sm:$0xff]
    %v95 = vld [vmem:[#allocation5 + $0x8] sm:$0xff]
    %v96 = vsub.f32 %v86, %v94
    %v97 = vsub.f32 %v87, %v95
    %v98 = vadd.f32 %v96, 1e-06
    %v99 = vadd.f32 %v97, 1e-06
    %v100 = vmul.f32 %v92, %v92
    %v101 = vmul.f32 %v93, %v93
    %vm102 = vcmask 261120
    %v103 = vsel %vm102, %v100, 0.0
    %104 = vadd.xlane.f32.xlu0 %v103
    %v105 = vpop.xlane.xlu0 %104
    %v106 = vsel %vm102, %v101, 0.0
    %107 = vadd.xlane.f32.xlu0 %v106
    %v108 = vpop.xlane.xlu0 %107
    %v109 = vrsqrt.pop %v105
    %v110 = vmul.f32 %v105, %v109
    %vm111 = vcmp.eq.f32.partialorder %v105, inf
    %v112 = vsel %vm111, %v105, %v110
    %vm113 = vcmp.eq.f32.partialorder %v105, 0.0
    %v114 = vand.u32 %v105, 2147483648
    %v115 = vsel %vm113, %v114, %v112
    %v116 = vrsqrt.pop %v108
    %v117 = vmul.f32 %v108, %v116
    %vm118 = vcmp.eq.f32.partialorder %v108, inf
    %v119 = vsel %vm118, %v108, %v117
    %vm120 = vcmp.eq.f32.partialorder %v108, 0.0
    %v121 = vand.u32 %v108, 2147483648
    %v122 = vsel %vm120, %v121, %v119
    %v123 = vmul.f32 %v98, %v98
    %v124 = vmul.f32 %v99, %v99
    %v125 = vsel %vm102, %v123, 0.0
    %126 = vadd.xlane.f32.xlu0 %v125
    %v127 = vpop.xlane.xlu0 %126
    %v128 = vsel %vm102, %v124, 0.0
    %129 = vadd.xlane.f32.xlu0 %v128
    %v130 = vpop.xlane.xlu0 %129
    %v131 = vrsqrt.pop %v127
    %v132 = vmul.f32 %v127, %v131
    %vm133 = vcmp.eq.f32.partialorder %v127, inf
    %v134 = vsel %vm133, %v127, %v132
    %vm135 = vcmp.eq.f32.partialorder %v127, 0.0
    %v136 = vand.u32 %v127, 2147483648
    %v137 = vsel %vm135, %v136, %v134
    %v138 = vrsqrt.pop %v130
    %v139 = vmul.f32 %v130, %v138
    %vm140 = vcmp.eq.f32.partialorder %v130, inf
    %v141 = vsel %vm140, %v130, %v139
    %vm142 = vcmp.eq.f32.partialorder %v130, 0.0
    %v143 = vand.u32 %v130, 2147483648
    %v144 = vsel %vm142, %v143, %v141
    %v145 = vsub.f32 %v115, %v137
    %v146 = vsub.f32 %v122, %v144
    %v147 = vadd.f32 %v145, 1.0
    %v148 = vadd.f32 %v146, 1.0
    %v149 = vmax.f32 %v147, 0.0
    %v150 = vmax.f32 %v148, 0.0
    %v151 = vmul.f32 %v149, %v84
    %v152 = vmul.f32 %v150, %v85
    %v153 = vld [vmem:[#allocation9] sm:$0x1]
    %vm154 = vcmask 7168
    %v155 = vsel %vm154, %v151, 0.0
    %v156 = vsel %vm154, %v152, 0.0
    %v157 = vadd.f32 %v155, %v156
    %158 = vadd.xlane.f32.xlu0 %v157
    %v159 = vpop.xlane.xlu0 %158
    %v160 = vrot.slane %v159, 4
    %v161 = vadd.f32 %v159, %v160
    %v162 = vrot.slane %v161, 2
    %v163 = vadd.f32 %v161, %v162
    %v164 = vrot.slane %v163, 1
    %v165 = vadd.f32 %v163, %v164
    %s166 = vtos %v165
    %v167 = vstv %s166
    %v168 = vadd.f32 %v153, %v167
    %vm169 = vcmask 0
    %170 = vst.msk [vmem:[#allocation9] sm:$0x1] %vm169, %v168
    %v171 = vld [vmem:[#allocation7] sm:$0xff]
    %v172 = vld [vmem:[#allocation7 + $0x8] sm:$0xff]
    %v173 = vld [vmem:[%s4] sm:$0xff]
    %v174 = vld [vmem:[%s4 + $0x8] sm:$0xff]
    %vm175 = vcmask 130048
    %v176 = vsel %vm175, %v171, -inf
    %177 = vmax.xlane.f32.xlu0 %v176
    %v178 = vpop.xlane.xlu0 %177
    %v179 = vsel %vm175, %v172, -inf
    %180 = vmax.xlane.f32.xlu0 %v179
    %v181 = vpop.xlane.xlu0 %180
    %v182 = vsub.f32 %v171, %v178
    %v183 = vsub.f32 %v172, %v181
    %v184 = vmul.f32 %v182, 1.442695
    %v185 = vpow.pop %v184
    %v186 = vmul.f32 %v183, 1.442695
    %v187 = vpow.pop %v186
    %v188 = vsel %vm175, %v185, 0.0
    %189 = vadd.xlane.f32.xlu0 %v188
    %v190 = vpop.xlane.xlu0 %189
    %v191 = vsel %vm175, %v187, 0.0
    %192 = vadd.xlane.f32.xlu0 %v191
    %v193 = vpop.xlane.xlu0 %192
    %v194 = vlog2.pop %v190
    %v195 = vmul.f32 %v194, 0.6931472
    %v196 = vlog2.pop %v193
    %v197 = vmul.f32 %v196, 0.6931472
    %v198 = vadd.f32 %v178, %v195
    %v199 = vadd.f32 %v181, %v197
    %v200 = vlaneseq
    %v201 = vand.u32 %v200, 127
    %202 = vset.pattern.permute.xlu0 0
    %203 = vperm.xlu0 %202, %v173
    %v204 = vpop.permute.xlu0 %203
    %205 = vset.pattern.permute.xlu0 0
    %206 = vperm.xlu0 %205, %v174
    %v207 = vpop.permute.xlu0 %206
    %vm208 = vcmp.eq.s32.totalorder %v201, %v204
    %vm209 = vcmp.eq.s32.totalorder %v201, %v207
    %v210 = vsel %vm208, %v171, 0.0
    %v211 = vsel %vm209, %v172, 0.0
    %v212 = vsel %vm175, %v210, 0.0
    %213 = vadd.xlane.f32.xlu0 %v212
    %v214 = vpop.xlane.xlu0 %213
    %v215 = vsel %vm175, %v211, 0.0
    %216 = vadd.xlane.f32.xlu0 %v215
    %v217 = vpop.xlane.xlu0 %216
    %v218 = vsub.f32 %v198, %v214
    %v219 = vsub.f32 %v199, %v217
    %v220 = vmul.f32 %v218, %v84
    %v221 = vmul.f32 %v219, %v85
    %v222 = vld [vmem:[#allocation11] sm:$0x1]
    %v223 = vsel %vm154, %v220, 0.0
    %v224 = vsel %vm154, %v221, 0.0
    %v225 = vadd.f32 %v223, %v224
    %226 = vadd.xlane.f32.xlu0 %v225
    %v227 = vpop.xlane.xlu0 %226
    %v228 = vrot.slane %v227, 4
    %v229 = vadd.f32 %v227, %v228
    %v230 = vrot.slane %v229, 2
    %v231 = vadd.f32 %v229, %v230
    %v232 = vrot.slane %v231, 1
    %v233 = vadd.f32 %v231, %v232
    %s234 = vtos %v233
    %v235 = vstv %s234
    %v236 = vadd.f32 %v222, %v235
    %237 = vst.msk [vmem:[#allocation11] sm:$0x1] %vm169, %v236
    // Predicated region
    $region38: #{tpu_custom_call.1} parent=1 // pred_check
      %p238 = pneg %p66
    $region39: #{tpu_custom_call.1} parent=1 // pred_check_branch
      %240 = sbr.rel (%p238) target = $region41
    $region40: #{tpu_custom_call.1} parent=1 // pred_region
      %v241 = vld [vmem:[#allocation9] sm:$0x1]
      %v242 = vmul.f32 %v241, 0.083333336
      %243 = vst.msk [vmem:[#allocation9] sm:$0x1] %vm169, %v242
      %v244 = vld [vmem:[#allocation11] sm:$0x1]
      %v245 = vmul.f32 %v244, 0.083333336
      %246 = vst.msk [vmem:[#allocation11] sm:$0x1] %vm169, %v245
      %v247 = vld [vmem:[#allocation9] sm:$0x1]
      %v248 = vld [vmem:[#allocation11] sm:$0x1]
      %v249 = vadd.f32 %v247, %v248
      %250 = vst.msk [vmem:[#allocation8] sm:$0x1] %vm169, %v249
    $region41: #{tpu_custom_call.1} parent=1 // pred_fallthru
      _
    // Predicated region
    $region42: #{tpu_custom_call.1} parent=1 // pred_check
      _
    $region43: #{tpu_custom_call.1} parent=1 // pred_check_branch
      %252 = sbr.rel (0) target = $region45
    $region44: #{tpu_custom_call.1} parent=1 // pred_region
      %s254 = ssub.s32 16, 16
      %255 = vsyncadd [#allocation4], %s254
      %s257 = sshll.u32 [#allocation8], 4
      %s258 = int_to_ptr.vmem [resolvable:$true] %s257
      %260 = dma.vmem_to_hbm [thread:$0]  %s258, 16, %s5, [#allocation4]
    $region45: #{tpu_custom_call.1} parent=1 // pred_fallthru
      _
    // Predicated region
    $region46: #{tpu_custom_call.1} parent=1 // pred_check
      _
    $region47: #{tpu_custom_call.1} parent=1 // pred_check_branch
      %262 = sbr.rel (0) target = $region49
    $region48: #{tpu_custom_call.1} parent=1 // pred_region
      %s264 = ssub.s32 16, 16
      %265 = vsyncadd [#allocation10], %s264
      %s267 = sshll.u32 [#allocation9], 4
      %s268 = int_to_ptr.vmem [resolvable:$true] %s267
      %270 = dma.vmem_to_hbm [thread:$0]  %s268, 16, %s6, [#allocation10]
    $region49: #{tpu_custom_call.1} parent=1 // pred_fallthru
      _
    // Predicated region
    $region50: #{tpu_custom_call.1} parent=1 // pred_check
      _
    $region51: #{tpu_custom_call.1} parent=1 // pred_check_branch
      %272 = sbr.rel (0) target = $region53
    $region52: #{tpu_custom_call.1} parent=1 // pred_region
      %s274 = ssub.s32 16, 16
      %275 = vsyncadd [#allocation10], %s274
      %s277 = sshll.u32 [#allocation11], 4
      %s278 = int_to_ptr.vmem [resolvable:$true] %s277
      %280 = dma.vmem_to_hbm [thread:$0]  %s278, 16, %s7, [#allocation10]
    $region53: #{tpu_custom_call.1} parent=1 // pred_fallthru
      _
    // Predicated region
    $region54: #{tpu_custom_call.1} parent=1 // pred_check
      _
    $region55: #{tpu_custom_call.1} parent=1 // pred_check_branch
      %282 = sbr.rel (0) target = $region57
    $region56: #{tpu_custom_call.1} parent=1 // pred_region
      %283 = dma.done [#allocation4], 16
    $region57: #{tpu_custom_call.1} parent=1 // pred_fallthru
      _
    // Predicated region
    $region58: #{tpu_custom_call.1} parent=1 // pred_check
      _
    $region59: #{tpu_custom_call.1} parent=1 // pred_check_branch
      %285 = sbr.rel (0) target = $region61
    $region60: #{tpu_custom_call.1} parent=1 // pred_region
      %286 = dma.done [#allocation10], 16
    $region61: #{tpu_custom_call.1} parent=1 // pred_fallthru
      _
    // Predicated region
    $region62: #{tpu_custom_call.1} parent=1 // pred_check
      _
    $region63: #{tpu_custom_call.1} parent=1 // pred_check_branch
      %288 = sbr.rel (0) target = $region65
    $region64: #{tpu_custom_call.1} parent=1 // pred_region
      %289 = dma.done [#allocation10], 16
    $region65: #{tpu_custom_call.1} parent=1 // pred_fallthru
      _
    %290 = vsyncpa [#allocation3], 1
    %291 = vsyncpa [#allocation6], 1
    %292 = vsyncpa [#allocation4], 1
    %293 = vsyncpa [#allocation10], 1

</llo_original>
